<compile_context>
chip_gen: v5e
topology: v5e:2x2
jax: 0.10.0
libtpu: 0.0.40
codegen_flags: <defaults>
</compile_context>

<pallas_src>
import functools

import jax
import jax.numpy as jnp
from jax.experimental import pallas as pl
from jax.experimental.pallas import tpu as pltpu


def gating_fusion_kernel(xg_ref, xk_ref,
                         wgg_ref, wgk_ref, bg_ref,
                         w1_ref, b1_ref, w2_ref, b2_ref,
                         out_ref):
    xg = xg_ref[...]                                   # (tile_n, D)
    xk = xk_ref[...]                                   # (tile_n, D)

    # Gate logits on VPU + cross-lane reduce (no 1-wide MXU matmul):
    #   logits = cat([xg, xk], 1) @ W_g^T + b_g
    wgg = wgg_ref[...]                                 # (1, D) broadcast over rows
    wgk = wgk_ref[...]                                 # (1, D)
    logits = jnp.sum(xg * wgg + xk * wgk, axis=-1, keepdims=True) + bg_ref[0, 0]
    g = jax.nn.sigmoid(logits)                         # (tile_n, 1)

    # fused @ W1 == g*(xg @ W1) + (1-g)*(xk @ W1)  (g is per-row scalar), so the
    # two MXU matmuls can start before the sigmoid/EUP result is ready.
    a = jnp.dot(xg, w1_ref[...], preferred_element_type=jnp.float32)
    b = jnp.dot(xk, w1_ref[...], preferred_element_type=jnp.float32)
    h = g * a + (1.0 - g) * b + b1_ref[...]            # (tile_n, F_hid)
    h = jnp.where(h > 0, h, 0.1 * h)                   # LeakyReLU(negative_slope=0.1)

    # Second projection into a lane-dense (128-multiple) padded output.
    z = jnp.dot(h, w2_ref[...], preferred_element_type=jnp.float32) + b2_ref[...]
    out_ref[...] = z.astype(out_ref.dtype)


def gating_fusion(x_gt, x_kg, params, *, tile_n=512):
    N, D = x_gt.shape
    assert x_kg.shape == (N, D), "gated blend requires dim_gt == dim_kg"
    F_hid = params["w1"].shape[1]
    F_out = params["w2"].shape[1]

    # Lane-dense output: pad W2 columns / b2 to a multiple of 128, slice later.
    F_pad = max(128, pl.cdiv(F_out, 128) * 128)
    w2p = jnp.zeros((F_hid, F_pad), jnp.float32).at[:, :F_out].set(params["w2"])
    b2p = jnp.zeros((1, F_pad), jnp.float32).at[:, :F_out].set(params["b2"])

    # Row tiling: single full block when N is small, else pad N to a multiple
    # of tile_n (multiple of 8, pipelineable).  Padded rows are sliced away.
    if N <= tile_n:
        tile_n = N
        n_pad = N
        xg, xk = x_gt, x_kg
    else:
        n_pad = pl.cdiv(N, tile_n) * tile_n
        xg = jnp.pad(x_gt, ((0, n_pad - N), (0, 0)))
        xk = jnp.pad(x_kg, ((0, n_pad - N), (0, 0)))
    grid = (n_pad // tile_n,)

    row_spec = pl.BlockSpec((tile_n, D), lambda i: (i, 0))
    const = lambda shape: pl.BlockSpec(shape, lambda i: (0, 0))  # stays VMEM-resident

    out = pl.pallas_call(
        gating_fusion_kernel,
        out_shape=jax.ShapeDtypeStruct((n_pad, F_pad), jnp.float32),
        grid=grid,
        in_specs=[
            row_spec,                                              # x_gt tile
            row_spec,                                              # x_kg tile
            const((1, D)),                                         # gate weights (gt half)
            const((1, D)),                                         # gate weights (kg half)
            pl.BlockSpec(memory_space=pltpu.MemorySpace.SMEM),     # gate bias scalar
            const((D, F_hid)),                                     # W1
            const((1, F_hid)),                                     # b1
            const((F_hid, F_pad)),                                 # W2 (padded)
            const((1, F_pad)),                                     # b2 (padded)
        ],
        out_specs=pl.BlockSpec((tile_n, F_pad), lambda i: (i, 0)),
        compiler_params=pltpu.CompilerParams(
            dimension_semantics=("parallel",),
            vmem_limit_bytes=32 * 1024 * 1024,
        ),
    )(xg, xk,
      params["wg_gt"], params["wg_kg"], params["bg"],
      params["w1"], params["b1"], w2p, b2p)

    return out[:N, :F_out]


def init_params(key, dim_gt, dim_kg, fused_dim=32):
    ks = jax.random.split(key, 6)
    scale_g = 1.0 / jnp.sqrt(dim_gt + dim_kg)
    scale_1 = 1.0 / jnp.sqrt(dim_gt)
    scale_2 = 1.0 / jnp.sqrt(fused_dim)
    return {
        # linear_g: Linear(dim_gt + dim_kg, 1) — weight row split into two halves,
        # stored as (1, D) rows so the kernel can do the VPU gate reduction.
        "wg_gt": jax.random.uniform(ks[0], (1, dim_gt), jnp.float32, -scale_g, scale_g),
        "wg_kg": jax.random.uniform(ks[1], (1, dim_kg), jnp.float32, -scale_g, scale_g),
        "bg":    jnp.zeros((1, 1), jnp.float32),
        # proj[0]: Linear(dim_gt, fused_dim), stored [in, out]
        "w1": jax.random.uniform(ks[2], (dim_gt, fused_dim), jnp.float32, -scale_1, scale_1),
        "b1": jax.random.uniform(ks[3], (1, fused_dim), jnp.float32, -scale_1, scale_1),
        # proj[2]: Linear(fused_dim, fused_dim), stored [in, out]
        "w2": jax.random.uniform(ks[4], (fused_dim, fused_dim), jnp.float32, -scale_2, scale_2),
        "b2": jax.random.uniform(ks[5], (1, fused_dim), jnp.float32, -scale_2, scale_2),
    }


def reference(x_gt, x_kg, p):
    logits = x_gt @ p["wg_gt"].T + x_kg @ p["wg_kg"].T + p["bg"]
    g = jax.nn.sigmoid(logits)
    fused = g * x_gt + (1.0 - g) * x_kg
    h = fused @ p["w1"] + p["b1"]
    h = jnp.where(h > 0, h, 0.1 * h)
    return h @ p["w2"] + p["b2"]


if __name__ == "__main__":
    # Gating fusion requires dim_gt == dim_kg (g*x_gt + (1-g)*x_kg blend).
    N, dim_gt, dim_kg, fused_dim = 8, 32, 32, 32

    key = jax.random.PRNGKey(0)
    k_in, k_p = jax.random.split(key)
    kx, ky = jax.random.split(k_in)

    x_gt = jax.random.normal(kx, (N, dim_gt), jnp.float32)
    x_kg = jax.random.normal(ky, (N, dim_kg), jnp.float32)
    params = init_params(k_p, dim_gt, dim_kg, fused_dim)

    z = gating_fusion(x_gt, x_kg, params)
    z = jax.block_until_ready(z)

    z_ref = reference(x_gt, x_kg, params)
    assert z.shape == (N, fused_dim)
    assert jnp.allclose(z, z_ref, atol=1e-5, rtol=1e-5)

    print("KERNEL_OK")
</pallas_src>

<mosaic_0001>
module attributes {stable_mosaic.version = 11 : i64} {
  func.func @gating_fusion_kernel(%arg0: i32, %arg1: memref<8x32xf32, #tpu.memory_space<vmem>>, %arg2: memref<8x32xf32, #tpu.memory_space<vmem>>, %arg3: memref<1x32xf32, #tpu.memory_space<vmem>>, %arg4: memref<1x32xf32, #tpu.memory_space<vmem>>, %arg5: memref<1x1xf32, #tpu.memory_space<smem>>, %arg6: memref<32x32xf32, #tpu.memory_space<vmem>>, %arg7: memref<1x32xf32, #tpu.memory_space<vmem>>, %arg8: memref<32x128xf32, #tpu.memory_space<vmem>>, %arg9: memref<1x128xf32, #tpu.memory_space<vmem>>, %arg10: memref<8x128xf32, #tpu.memory_space<vmem>>) attributes {dimension_semantics = [#tpu.dimension_semantics<parallel>], iteration_bounds = array<i64: 1>, scalar_prefetch = 0 : i64, scratch_operands = 0 : i64, tpu.core_type = #tpu.core_type<tc>, window_params = [{transform_indices = @transform_0, window_bounds = array<i64: 8, 32>}, {transform_indices = @transform_1, window_bounds = array<i64: 8, 32>}, {pipeline_mode = #tpu.pipeline_mode<synchronous>, transform_indices = @transform_2, window_bounds = array<i64: 1, 32>}, {pipeline_mode = #tpu.pipeline_mode<synchronous>, transform_indices = @transform_3, window_bounds = array<i64: 1, 32>}, {transform_indices = @transform_4, window_bounds = array<i64: 1, 1>}, {pipeline_mode = #tpu.pipeline_mode<synchronous>, transform_indices = @transform_5, window_bounds = array<i64: 32, 32>}, {pipeline_mode = #tpu.pipeline_mode<synchronous>, transform_indices = @transform_6, window_bounds = array<i64: 1, 32>}, {pipeline_mode = #tpu.pipeline_mode<synchronous>, transform_indices = @transform_7, window_bounds = array<i64: 32, 128>}, {pipeline_mode = #tpu.pipeline_mode<synchronous>, transform_indices = @transform_8, window_bounds = array<i64: 1, 128>}, {transform_indices = @transform_9, window_bounds = array<i64: 8, 128>}]} {
    %c0 = arith.constant 0 : index
    %c0_0 = arith.constant 0 : index
    %0 = vector.load %arg1[%c0, %c0_0] : memref<8x32xf32, #tpu.memory_space<vmem>>, vector<8x32xf32>
    %c0_1 = arith.constant 0 : index
    %c0_2 = arith.constant 0 : index
    %1 = vector.load %arg2[%c0_1, %c0_2] : memref<8x32xf32, #tpu.memory_space<vmem>>, vector<8x32xf32>
    %c0_3 = arith.constant 0 : index
    %c0_4 = arith.constant 0 : index
    %2 = vector.load %arg3[%c0_3, %c0_4] : memref<1x32xf32, #tpu.memory_space<vmem>>, vector<1x32xf32>
    %c0_5 = arith.constant 0 : index
    %c0_6 = arith.constant 0 : index
    %3 = vector.load %arg4[%c0_5, %c0_6] : memref<1x32xf32, #tpu.memory_space<vmem>>, vector<1x32xf32>
    %4 = vector.broadcast %2 : vector<1x32xf32> to vector<8x32xf32>
    %5 = arith.mulf %0, %4 : vector<8x32xf32>
    %6 = vector.broadcast %3 : vector<1x32xf32> to vector<8x32xf32>
    %7 = arith.mulf %1, %6 : vector<8x32xf32>
    %8 = arith.addf %5, %7 : vector<8x32xf32>
    %cst = arith.constant dense<0.000000e+00> : vector<8xf32>
    %9 = vector.multi_reduction <add>, %8, %cst [1] : vector<8x32xf32> to vector<8xf32>
    %10 = vector.shape_cast %9 : vector<8xf32> to vector<8x1xf32>
    %c0_7 = arith.constant 0 : index
    %c0_8 = arith.constant 0 : index
    %11 = memref.load %arg5[%c0_7, %c0_8] : memref<1x1xf32, #tpu.memory_space<smem>>
    %12 = vector.broadcast %11 : f32 to vector<8x1xf32>
    %13 = arith.addf %10, %12 : vector<8x1xf32>
    %14 = arith.negf %13 : vector<8x1xf32>
    %15 = math.exp %14 : vector<8x1xf32>
    %cst_9 = arith.constant 1.000000e+00 : f32
    %16 = vector.broadcast %cst_9 : f32 to vector<8x1xf32>
    %17 = arith.addf %16, %15 : vector<8x1xf32>
    %18 = arith.divf %16, %17 : vector<8x1xf32>
    %c0_10 = arith.constant 0 : index
    %c0_11 = arith.constant 0 : index
    %19 = vector.load %arg6[%c0_10, %c0_11] : memref<32x32xf32, #tpu.memory_space<vmem>>, vector<32x32xf32>
    %cst_12 = arith.constant dense<0.000000e+00> : vector<8x32xf32>
    %20 = tpu.matmul %0, %19, %cst_12 {dimension_numbers = #tpu.dot_dimension_numbers<[1], [0], [0], [1], [0, 0, 1, 1], [], []>} : vector<8x32xf32>, vector<32x32xf32>, vector<8x32xf32> -> vector<8x32xf32>
    %c0_13 = arith.constant 0 : index
    %c0_14 = arith.constant 0 : index
    %21 = vector.load %arg6[%c0_13, %c0_14] : memref<32x32xf32, #tpu.memory_space<vmem>>, vector<32x32xf32>
    %cst_15 = arith.constant dense<0.000000e+00> : vector<8x32xf32>
    %22 = tpu.matmul %1, %21, %cst_15 {dimension_numbers = #tpu.dot_dimension_numbers<[1], [0], [0], [1], [0, 0, 1, 1], [], []>} : vector<8x32xf32>, vector<32x32xf32>, vector<8x32xf32> -> vector<8x32xf32>
    %23 = vector.broadcast %18 : vector<8x1xf32> to vector<8x32xf32>
    %24 = arith.mulf %23, %20 : vector<8x32xf32>
    %cst_16 = arith.constant 1.000000e+00 : f32
    %25 = vector.broadcast %cst_16 : f32 to vector<8x1xf32>
    %26 = arith.subf %25, %18 : vector<8x1xf32>
    %27 = vector.broadcast %26 : vector<8x1xf32> to vector<8x32xf32>
    %28 = arith.mulf %27, %22 : vector<8x32xf32>
    %29 = arith.addf %24, %28 : vector<8x32xf32>
    %c0_17 = arith.constant 0 : index
    %c0_18 = arith.constant 0 : index
    %30 = vector.load %arg7[%c0_17, %c0_18] : memref<1x32xf32, #tpu.memory_space<vmem>>, vector<1x32xf32>
    %31 = vector.broadcast %30 : vector<1x32xf32> to vector<8x32xf32>
    %32 = arith.addf %29, %31 : vector<8x32xf32>
    %cst_19 = arith.constant 0.000000e+00 : f32
    %33 = vector.broadcast %cst_19 : f32 to vector<8x32xf32>
    %34 = arith.cmpf ogt, %32, %33 : vector<8x32xf32>
    %cst_20 = arith.constant 1.000000e-01 : f32
    %35 = vector.broadcast %cst_20 : f32 to vector<8x32xf32>
    %36 = arith.mulf %35, %32 : vector<8x32xf32>
    %37 = arith.select %34, %32, %36 : vector<8x32xi1>, vector<8x32xf32>
    %c0_21 = arith.constant 0 : index
    %c0_22 = arith.constant 0 : index
    %38 = vector.load %arg8[%c0_21, %c0_22] : memref<32x128xf32, #tpu.memory_space<vmem>>, vector<32x128xf32>
    %cst_23 = arith.constant dense<0.000000e+00> : vector<8x128xf32>
    %39 = tpu.matmul %37, %38, %cst_23 {dimension_numbers = #tpu.dot_dimension_numbers<[1], [0], [0], [1], [0, 0, 1, 1], [], []>} : vector<8x32xf32>, vector<32x128xf32>, vector<8x128xf32> -> vector<8x128xf32>
    %c0_24 = arith.constant 0 : index
    %c0_25 = arith.constant 0 : index
    %40 = vector.load %arg9[%c0_24, %c0_25] : memref<1x128xf32, #tpu.memory_space<vmem>>, vector<1x128xf32>
    %41 = vector.broadcast %40 : vector<1x128xf32> to vector<8x128xf32>
    %42 = arith.addf %39, %41 : vector<8x128xf32>
    %c0_26 = arith.constant 0 : index
    %c0_27 = arith.constant 0 : index
    %43 = vector.load %arg10[%c0_26, %c0_27] : memref<8x128xf32, #tpu.memory_space<vmem>>, vector<8x128xf32>
    tpu.vector_store %arg10[%c0_26, %c0_27], %42 {strides = array<i32>} : memref<8x128xf32, #tpu.memory_space<vmem>>, vector<8x128xf32>,
    return
  }
  func.func @transform_0(%arg0: i32) -> (i32, i32) {
    %c0_i32 = arith.constant 0 : i32
    %c0_i32_0 = arith.constant 0 : i32
    return %arg0, %c0_i32 : i32, i32
  }
  func.func @transform_1(%arg0: i32) -> (i32, i32) {
    %c0_i32 = arith.constant 0 : i32
    %c0_i32_0 = arith.constant 0 : i32
    return %arg0, %c0_i32 : i32, i32
  }
  func.func @transform_2(%arg0: i32) -> (i32, i32) {
    %c0_i32 = arith.constant 0 : i32
    %c0_i32_0 = arith.constant 0 : i32
    %c0_i32_1 = arith.constant 0 : i32
    return %c0_i32, %c0_i32_0 : i32, i32
  }
  func.func @transform_3(%arg0: i32) -> (i32, i32) {
    %c0_i32 = arith.constant 0 : i32
    %c0_i32_0 = arith.constant 0 : i32
    %c0_i32_1 = arith.constant 0 : i32
    return %c0_i32, %c0_i32_0 : i32, i32
  }
  func.func @transform_4(%arg0: i32) -> (i32, i32) {
    %c0_i32 = arith.constant 0 : i32
    %c0_i32_0 = arith.constant 0 : i32
    %c0_i32_1 = arith.constant 0 : i32
    return %c0_i32, %c0_i32_0 : i32, i32
  }
  func.func @transform_5(%arg0: i32) -> (i32, i32) {
    %c0_i32 = arith.constant 0 : i32
    %c0_i32_0 = arith.constant 0 : i32
    %c0_i32_1 = arith.constant 0 : i32
    return %c0_i32, %c0_i32_0 : i32, i32
  }
  func.func @transform_6(%arg0: i32) -> (i32, i32) {
    %c0_i32 = arith.constant 0 : i32
    %c0_i32_0 = arith.constant 0 : i32
    %c0_i32_1 = arith.constant 0 : i32
    return %c0_i32, %c0_i32_0 : i32, i32
  }
  func.func @transform_7(%arg0: i32) -> (i32, i32) {
    %c0_i32 = arith.constant 0 : i32
    %c0_i32_0 = arith.constant 0 : i32
    %c0_i32_1 = arith.constant 0 : i32
    return %c0_i32, %c0_i32_0 : i32, i32
  }
  func.func @transform_8(%arg0: i32) -> (i32, i32) {
    %c0_i32 = arith.constant 0 : i32
    %c0_i32_0 = arith.constant 0 : i32
    %c0_i32_1 = arith.constant 0 : i32
    return %c0_i32, %c0_i32_0 : i32, i32
  }
  func.func @transform_9(%arg0: i32) -> (i32, i32) {
    %c0_i32 = arith.constant 0 : i32
    %c0_i32_0 = arith.constant 0 : i32
    return %arg0, %c0_i32 : i32, i32
  }
}

</mosaic_0001>

<llo_original>
// kernel: tpu_custom_call.1
$region0: #{tpu_custom_call.1}
  #allocation0 [shape = 'u32[]', space=smem, size = 0x4, offset = 0x4, fixed_abs, tag = 'smem constant byte address 0x4 - core index']
  #allocation1 [shape = 'u32[72,128]{1,0:T(1,128)}', space=vmem, size = 0x9000, scoped, tag = 'internal scratch']
  #allocation2 [shape = 'f32[1,1]{1,0:T(1,128)S(6)}', space=smem, size = 0x200, scoped, tag = 'scoped memory for tpu_custom_call.1']
  %s0 = inlined_call_operand.hbm [shape: f32[8,32], index: 0, kind: input, shape index: {}]
  %s1 = inlined_call_operand.hbm [shape: f32[8,32], index: 1, kind: input, shape index: {}]
  %s2 = inlined_call_operand.vmem [shape: f32[1,32], index: 2, kind: input, shape index: {}]
  %s3 = inlined_call_operand.vmem [shape: f32[1,32], index: 3, kind: input, shape index: {}]
  %s4 = inlined_call_operand.<no memory space> [shape: f32[1,1], index: 4, kind: input, shape index: {}]
  %s5 = inlined_call_operand.hbm [shape: f32[32,32], index: 5, kind: input, shape index: {}]
  %s6 = inlined_call_operand.vmem [shape: f32[1,32], index: 6, kind: input, shape index: {}]
  %s7 = inlined_call_operand.hbm [shape: f32[32,128], index: 7, kind: input, shape index: {}]
  %s8 = inlined_call_operand.vmem [shape: f32[1,128], index: 8, kind: input, shape index: {}]
  %s9 = inlined_call_operand.hbm [shape: f32[8,128], index: 9, kind: output, shape index: {}]
  %s10 = sld [smem:[#allocation0]]
  $region62: #{tpu_custom_call.1} parent=0
    _
  %s12 = ssub.s32 1, %s10
  %s13 = scalar_select 0, %s12, %s10
  %14 = sst [smem:[#allocation2]] %s4
  $region1: #{tpu_custom_call.1} parent=0
    #allocation3 [shape = 'u8[4096]{0}', space=vmem, size = 0x1000, scoped, tag = 'input window, operand 0, single buffered']
    #allocation4 [shape = 's32[1]{0}', space=sflag, size = 0x4, scoped, tag = 'scoped memory for tpu_custom_call.1']
    #allocation5 [shape = 's32[1]{0}', space=sflag, size = 0x4, scoped, tag = 'scoped memory for tpu_custom_call.1']
    #allocation6 [shape = 'u8[4096]{0}', space=vmem, size = 0x1000, scoped, tag = 'input window, operand 1, single buffered']
    #allocation7 [shape = 's32[1]{0}', space=sflag, size = 0x4, scoped, tag = 'scoped memory for tpu_custom_call.1']
    #allocation8 [shape = 'u8[16384]{0}', space=vmem, size = 0x4000, scoped, tag = 'input window, operand 5, single buffered']
    #allocation9 [shape = 'u8[16384]{0}', space=vmem, size = 0x4000, scoped, tag = 'input window, operand 7, single buffered']
    #allocation10 [shape = 's32[1]{0}', space=sflag, size = 0x4, scoped, tag = 'scoped memory for tpu_custom_call.1']
    #allocation11 [shape = 'u8[4096]{0}', space=vmem, size = 0x1000, scoped, tag = 'output window, operand 0, single buffered']
    %15 = vsyncpa [#allocation4], 0
    %16 = vsyncpa [#allocation7], 0
    %17 = vsyncpa [#allocation10], 0
    %18 = vsyncpa [#allocation5], 0
    // Predicated region
    $region2: #{tpu_custom_call.1} parent=1 // pred_check
      _
    $region3: #{tpu_custom_call.1} parent=1 // pred_check_branch
      %20 = sbr.rel (0) target = $region5
    $region4: #{tpu_custom_call.1} parent=1 // pred_region
      %22 = vsyncadd [#allocation4], 0
      %s24 = sshll.u32 %s0, 4
      %s25 = int_to_ptr.hbm [resolvable:$true] %s24
      %s26 = sshll.u32 [#allocation3], 4
      %s27 = int_to_ptr.vmem [resolvable:$true] %s26
      %29 = dma.hbm_to_vmem [thread:$0]  %s25, 128, %s27, [#allocation4]
    $region5: #{tpu_custom_call.1} parent=1 // pred_fallthru
      _
    // Predicated region
    $region6: #{tpu_custom_call.1} parent=1 // pred_check
      _
    $region7: #{tpu_custom_call.1} parent=1 // pred_check_branch
      %31 = sbr.rel (0) target = $region9
    $region8: #{tpu_custom_call.1} parent=1 // pred_region
      %33 = vsyncadd [#allocation7], 0
      %s35 = sshll.u32 %s1, 4
      %s36 = int_to_ptr.hbm [resolvable:$true] %s35
      %s37 = sshll.u32 [#allocation6], 4
      %s38 = int_to_ptr.vmem [resolvable:$true] %s37
      %40 = dma.hbm_to_vmem [thread:$0]  %s36, 128, %s38, [#allocation7]
    $region9: #{tpu_custom_call.1} parent=1 // pred_fallthru
      _
    // Predicated region
    $region10: #{tpu_custom_call.1} parent=1 // pred_check
      _
    $region11: #{tpu_custom_call.1} parent=1 // pred_check_branch
      %42 = sbr.rel (0) target = $region13
    $region12: #{tpu_custom_call.1} parent=1 // pred_region
      _
    $region13: #{tpu_custom_call.1} parent=1 // pred_fallthru
      _
    // Predicated region
    $region14: #{tpu_custom_call.1} parent=1 // pred_check
      _
    $region15: #{tpu_custom_call.1} parent=1 // pred_check_branch
      %44 = sbr.rel (0) target = $region17
    $region16: #{tpu_custom_call.1} parent=1 // pred_region
      _
    $region17: #{tpu_custom_call.1} parent=1 // pred_fallthru
      _
    // Predicated region
    $region18: #{tpu_custom_call.1} parent=1 // pred_check
      _
    $region19: #{tpu_custom_call.1} parent=1 // pred_check_branch
      %46 = sbr.rel (0) target = $region21
    $region20: #{tpu_custom_call.1} parent=1 // pred_region
      _
    $region21: #{tpu_custom_call.1} parent=1 // pred_fallthru
      _
    // Predicated region
    $region22: #{tpu_custom_call.1} parent=1 // pred_check
      _
    $region23: #{tpu_custom_call.1} parent=1 // pred_check_branch
      %48 = sbr.rel (0) target = $region25
    $region24: #{tpu_custom_call.1} parent=1 // pred_region
      %50 = vsyncadd [#allocation7], 0
      %s51 = sshll.u32 %s5, 4
      %s52 = int_to_ptr.hbm [resolvable:$true] %s51
      %s53 = sshll.u32 [#allocation8], 4
      %s54 = int_to_ptr.vmem [resolvable:$true] %s53
      %59 = dma.hbm_to_vmem [thread:$0]  %s52, 512, %s54, [#allocation7], 128, 128, 8
    $region25: #{tpu_custom_call.1} parent=1 // pred_fallthru
      _
    // Predicated region
    $region26: #{tpu_custom_call.1} parent=1 // pred_check
      _
    $region27: #{tpu_custom_call.1} parent=1 // pred_check_branch
      %61 = sbr.rel (0) target = $region29
    $region28: #{tpu_custom_call.1} parent=1 // pred_region
      _
    $region29: #{tpu_custom_call.1} parent=1 // pred_fallthru
      _
    // Predicated region
    $region30: #{tpu_custom_call.1} parent=1 // pred_check
      _
    $region31: #{tpu_custom_call.1} parent=1 // pred_check_branch
      %63 = sbr.rel (0) target = $region33
    $region32: #{tpu_custom_call.1} parent=1 // pred_region
      %65 = vsyncadd [#allocation10], 0
      %s66 = sshll.u32 %s7, 4
      %s67 = int_to_ptr.hbm [resolvable:$true] %s66
      %s68 = sshll.u32 [#allocation9], 4
      %s69 = int_to_ptr.vmem [resolvable:$true] %s68
      %74 = dma.hbm_to_vmem [thread:$0]  %s67, 512, %s69, [#allocation10], 128, 128, 8
    $region33: #{tpu_custom_call.1} parent=1 // pred_fallthru
      _
    // Predicated region
    $region34: #{tpu_custom_call.1} parent=1 // pred_check
      _
    $region35: #{tpu_custom_call.1} parent=1 // pred_check_branch
      %76 = sbr.rel (0) target = $region37
    $region36: #{tpu_custom_call.1} parent=1 // pred_region
      _
    $region37: #{tpu_custom_call.1} parent=1 // pred_fallthru
      _
    // Predicated region
    $region38: #{tpu_custom_call.1} parent=1 // pred_check
      _
    $region39: #{tpu_custom_call.1} parent=1 // pred_check_branch
      %78 = sbr.rel (0) target = $region41
    $region40: #{tpu_custom_call.1} parent=1 // pred_region
      %80 = dma.done [#allocation4], 128
    $region41: #{tpu_custom_call.1} parent=1 // pred_fallthru
      _
    // Predicated region
    $region42: #{tpu_custom_call.1} parent=1 // pred_check
      _
    $region43: #{tpu_custom_call.1} parent=1 // pred_check_branch
      %82 = sbr.rel (0) target = $region45
    $region44: #{tpu_custom_call.1} parent=1 // pred_region
      %84 = dma.done [#allocation7], 128
    $region45: #{tpu_custom_call.1} parent=1 // pred_fallthru
      _
    // Predicated region
    $region46: #{tpu_custom_call.1} parent=1 // pred_check
      _
    $region47: #{tpu_custom_call.1} parent=1 // pred_check_branch
      %86 = sbr.rel (0) target = $region49
    $region48: #{tpu_custom_call.1} parent=1 // pred_region
      %88 = dma.done [#allocation7], 512
    $region49: #{tpu_custom_call.1} parent=1 // pred_fallthru
      _
    // Predicated region
    $region50: #{tpu_custom_call.1} parent=1 // pred_check
      _
    $region51: #{tpu_custom_call.1} parent=1 // pred_check_branch
      %90 = sbr.rel (0) target = $region53
    $region52: #{tpu_custom_call.1} parent=1 // pred_region
      %92 = dma.done [#allocation10], 512
    $region53: #{tpu_custom_call.1} parent=1 // pred_fallthru
      _
    %v93 = vld [vmem:[#allocation3] sm:$0xff]
    %v94 = vld [vmem:[#allocation6] sm:$0xff]
    %v95 = vld [vmem:[%s2] sm:$0x1]
    %v96 = vld [vmem:[%s3] sm:$0x1]
    %v98 = vperm.slane %v95, 0
    %v100 = vmul.f32 %v93, %v98
    %v102 = vperm.slane %v96, 0
    %v104 = vmul.f32 %v94, %v102
    %v105 = vadd.f32 %v100, %v104
    %vm106 = vcmask 261120
    %v107 = vsel %vm106, %v105, 0.0
    %108 = vadd.xlane.f32.xlu0 %v107
    %v109 = vpop.xlane.xlu0 %108
    %s110 = sld [smem:[#allocation2]]
    %v111 = vstv %s110
    %v112 = vadd.f32 %v109, %v111
    %v113 = vxor.u32 %v112, 2147483648
    %v114 = vmul.f32 %v113, 1.442695
    %v115 = vpow.pop %v114
    %v116 = vadd.f32 %v115, 1.0
    %v117 = vrcp.pop %v116
    %v118 = vmul.f32 %v116, %v117
    %v119 = vsub.f32 1.0, %v118
    %v120 = vmul.f32 %v117, %v119
    %v121 = vadd.f32 %v117, %v120
    %vm122 = vweird.f32 %v116
    %vm123 = vweird.f32 %v117
    %vm124 = vmor %vm122, %vm123
    %v125 = vsel %vm124, %v117, %v121
    %v126 = vand.u32 2147483647, %v116
    %vm127 = vcmp.eq.f32.partialorder %v126, 8.507059e+37
    %v128 = vand.u32 %v116, 2147483648
    %v129 = vor.u32 1.1754944e-38, %v128
    %v130 = vsel %vm127, %v129, %v125
    %v131 = vmul.f32 1.0, %v130
    %v132 = vld [vmem:[#allocation8] sm:$0xff]
    %v133 = vld [vmem:[#allocation8 + $0x8] sm:$0xff]
    %v134 = vld [vmem:[#allocation8 + $0x10] sm:$0xff]
    %v135 = vld [vmem:[#allocation8 + $0x18] sm:$0xff]
    %v137 = vsel %vm106, %v93, 0
    %139 = vmatpush.msra.mxu0 0.0
    %140 = vmatpush.msra.mxu0 0.0
    %141 = vmatpush.msra.mxu0 0.0
    %142 = vmatpush.msra.mxu0 0.0
    %143 = vmatpush.msra.mxu0 0.0
    %144 = vmatpush.msra.mxu0 0.0
    %145 = vmatpush.msra.mxu0 0.0
    %146 = vmatpush.msra.mxu0 0.0
    %147 = vmatpush.msra.mxu0 0.0
    %148 = vmatpush.msra.mxu0 0.0
    %149 = vmatpush.msra.mxu0 0.0
    %150 = vmatpush.msra.mxu0 0.0
    %151 = vmatpush.msra.mxu0 %v135
    %152 = vmatpush.msra.mxu0 %v134
    %153 = vmatpush.msra.mxu0 %v133
    %154 = vmatpush.msra.mxu0 %v132
    %155 = vmatmul.f32.gmra.mxu0 %v137
    %v156 = vpop.f32.mrf.mxu0
    %v157 = vadd.f32 0.0, %v156
    %158 = vdwg.mxu0
    %v160 = vsel %vm106, %v94, 0
    %162 = vmatpush.msra.mxu0 0.0
    %163 = vmatpush.msra.mxu0 0.0
    %164 = vmatpush.msra.mxu0 0.0
    %165 = vmatpush.msra.mxu0 0.0
    %166 = vmatpush.msra.mxu0 0.0
    %167 = vmatpush.msra.mxu0 0.0
    %168 = vmatpush.msra.mxu0 0.0
    %169 = vmatpush.msra.mxu0 0.0
    %170 = vmatpush.msra.mxu0 0.0
    %171 = vmatpush.msra.mxu0 0.0
    %172 = vmatpush.msra.mxu0 0.0
    %173 = vmatpush.msra.mxu0 0.0
    %174 = vmatpush.msra.mxu0 %v135
    %175 = vmatpush.msra.mxu0 %v134
    %176 = vmatpush.msra.mxu0 %v133
    %177 = vmatpush.msra.mxu0 %v132
    %178 = vmatmul.f32.gmra.mxu0 %v160
    %v179 = vpop.f32.mrf.mxu0
    %v180 = vadd.f32 0.0, %v179
    %181 = vdwg.mxu0
    %v182 = vmul.f32 %v131, %v157
    %v183 = vsub.f32 1.0, %v131
    %v184 = vmul.f32 %v183, %v180
    %v185 = vadd.f32 %v182, %v184
    %v186 = vld [vmem:[%s6] sm:$0x1]
    %v188 = vperm.slane %v186, 0
    %v190 = vadd.f32 %v185, %v188
    %vm191 = vcmp.gt.f32.partialorder %v190, 0.0
    %v192 = vmul.f32 %v190, 0.1
    %v193 = vsel %vm191, %v190, %v192
    %v194 = vld [vmem:[#allocation9] sm:$0xff]
    %v195 = vld [vmem:[#allocation9 + $0x8] sm:$0xff]
    %v196 = vld [vmem:[#allocation9 + $0x10] sm:$0xff]
    %v197 = vld [vmem:[#allocation9 + $0x18] sm:$0xff]
    %v198 = vld [vmem:[%s8] sm:$0x1]
    %v200 = vperm.slane %v198, 0
    %v203 = vsel %vm106, %v193, 0
    %205 = vmatpush.msra.mxu0 0.0
    %206 = vmatpush.msra.mxu0 0.0
    %207 = vmatpush.msra.mxu0 0.0
    %208 = vmatpush.msra.mxu0 0.0
    %209 = vmatpush.msra.mxu0 0.0
    %210 = vmatpush.msra.mxu0 0.0
    %211 = vmatpush.msra.mxu0 0.0
    %212 = vmatpush.msra.mxu0 0.0
    %213 = vmatpush.msra.mxu0 0.0
    %214 = vmatpush.msra.mxu0 0.0
    %215 = vmatpush.msra.mxu0 0.0
    %216 = vmatpush.msra.mxu0 0.0
    %217 = vmatpush.msra.mxu0 %v197
    %218 = vmatpush.msra.mxu0 %v196
    %219 = vmatpush.msra.mxu0 %v195
    %220 = vmatpush.msra.mxu0 %v194
    %221 = vmatmul.f32.gmra.mxu0 %v203
    %v222 = vpop.f32.mrf.mxu0
    %v223 = vadd.f32 %v200, %v222
    %224 = vdwg.mxu0
    %225 = vst [vmem:[#allocation11] sm:$0xff] %v223
    // Predicated region
    $region54: #{tpu_custom_call.1} parent=1 // pred_check
      _
    $region55: #{tpu_custom_call.1} parent=1 // pred_check_branch
      %227 = sbr.rel (0) target = $region57
    $region56: #{tpu_custom_call.1} parent=1 // pred_region
      %229 = vsyncadd [#allocation5], 0
      %s231 = sshll.u32 [#allocation11], 4
      %s232 = int_to_ptr.vmem [resolvable:$true] %s231
      %s233 = sshll.u32 %s9, 4
      %s234 = int_to_ptr.hbm [resolvable:$true] %s233
      %236 = dma.vmem_to_hbm [thread:$0]  %s232, 128, %s234, [#allocation5]
    $region57: #{tpu_custom_call.1} parent=1 // pred_fallthru
      _
    // Predicated region
    $region58: #{tpu_custom_call.1} parent=1 // pred_check
      _
    $region59: #{tpu_custom_call.1} parent=1 // pred_check_branch
      %238 = sbr.rel (0) target = $region61
    $region60: #{tpu_custom_call.1} parent=1 // pred_region
      %240 = dma.done [#allocation5], 128
    $region61: #{tpu_custom_call.1} parent=1 // pred_fallthru
      _
    %241 = vsyncpa [#allocation4], 1
    %242 = vsyncpa [#allocation7], 1
    %243 = vsyncpa [#allocation10], 1
    %244 = vsyncpa [#allocation5], 1

</llo_original>
